<compile_context>
chip_gen: v6e
topology: v6e:2x2x1
jax: 0.10.0
libtpu: 0.0.40
codegen_flags: <defaults>
</compile_context>

<pallas_src>
import jax
import jax.numpy as jnp
from jax.experimental import pallas as pl
from jax.experimental.pallas import tpu as pltpu


def _make_gap_kernel(inv_hw, tail_cols):
    """tail_cols: static count of valid columns in the LAST hw block.
    0 means every hw block is full width (no tail handling needed)."""

    def kernel(x_ref, o_ref, acc_ref):
        # x_ref: (t_rows, t_hw); o_ref: (t_rows, 1); acc_ref: f32 scratch.
        k = pl.program_id(1)
        last = pl.num_programs(1) - 1

        @pl.when(k == 0)
        def _init():
            acc_ref[...] = jnp.zeros_like(acc_ref)

        if tail_cols == 0:
            acc_ref[...] += jnp.sum(
                x_ref[...].astype(jnp.float32), axis=-1, keepdims=True
            )
        else:
            @pl.when(k != last)
            def _full():
                acc_ref[...] += jnp.sum(
                    x_ref[...].astype(jnp.float32), axis=-1, keepdims=True
                )

            @pl.when(k == last)
            def _tail():
                # Static slice: read only the valid columns of the ragged
                # final HW block (the rest of the block is undefined VMEM).
                acc_ref[...] += jnp.sum(
                    x_ref[:, :tail_cols].astype(jnp.float32),
                    axis=-1, keepdims=True,
                )

        @pl.when(k == last)
        def _finalize():
            o_ref[...] = (acc_ref[...] * inv_hw).astype(o_ref.dtype)

    return kernel


def _round_up(x, m):
    return ((x + m - 1) // m) * m


def _tpu_vmem_bytes():
    try:
        return int(pltpu.get_tpu_info().vmem_capacity_bytes)
    except Exception:
        return 64 << 20  # conservative fallback (v7x per-TC VMEM)


def _num_tensorcores():
    # v7x has 2 TensorCores per chip; v5e / v6e have 1.
    try:
        d = jax.devices()[0]
        for attr in ("num_cores", "core_count"):
            v = getattr(d, attr, None)
            if v:
                return int(v)
    except Exception:
        pass
    try:
        info = pltpu.get_tpu_info()
        for attr in ("num_cores", "core_count", "num_tensorcores"):
            v = getattr(info, attr, None)
            if v:
                return int(v)
        # Heuristic: the 2-TC generation (v7x) is the one with 64 MiB VMEM/TC.
        if int(info.vmem_capacity_bytes) <= (64 << 20):
            return 2
    except Exception:
        pass
    return 1


def _choose_tiles(rows, hw, itemsize, tile_budget_bytes, num_cores,
                  user_tile_rows=None):
    # sublane multiple: 8 (f32) / 16 (bf16) / 32 (int8/fp8)
    sublane = max(8, 32 // itemsize)
    max_tile_hw = 2048  # multiple of 128

    # Full-extent HW block when it fits; otherwise a 128-multiple tile with the
    # ragged tail handled in-kernel (no rounding of HW => no junk traffic).
    tile_hw = hw if hw <= max_tile_hw else max_tile_hw

    # VMEM footprint of a (t_rows, t_hw) buffer is lane-padded to 128.
    padded_hw = _round_up(tile_hw, 128)

    if user_tile_rows is not None:
        tile_rows = max(sublane, _round_up(int(user_tile_rows), sublane))
    else:
        tile_rows = tile_budget_bytes // (padded_hw * itemsize)
        tile_rows = max(sublane, (tile_rows // sublane) * sublane)

    if tile_rows >= rows:
        tile_rows = rows  # full-extent row block: always a legal block shape

    # Balance the "parallel" rows axis across TensorCores (v7x megacore only):
    # make the row-tile count a multiple of the core count.
    if num_cores >= 2 and rows >= num_cores * sublane:
        n_tiles = pl.cdiv(rows, tile_rows)
        if n_tiles % num_cores != 0:
            n_tiles = _round_up(n_tiles, num_cores)
            tile_rows = max(sublane, _round_up(pl.cdiv(rows, n_tiles), sublane))

    return tile_rows, tile_hw


def global_avg_pool(x, flatten: bool = False, tile_rows=None):
    """x: (N, C, H, W). Returns (N, C) if flatten else (N, C, 1, 1)."""
    n, c, h, w = x.shape
    rows = n * c
    hw = h * w
    itemsize = jnp.dtype(x.dtype).itemsize

    phys_vmem = _tpu_vmem_bytes()
    num_cores = _num_tensorcores()
    # 8 MiB per input tile: 2 pipeline buffers = 16 MiB + tiny scratch, well
    # inside the VMEM limit on every generation, and large enough to amortize
    # per-grid-step overhead even at v7x HBM bandwidth.
    tile_budget = 8 << 20
    vmem_limit = min(int(phys_vmem * 3 // 4), 100 << 20)

    t_rows, t_hw = _choose_tiles(rows, hw, itemsize, tile_budget, num_cores,
                                 tile_rows)

    grid = (pl.cdiv(rows, t_rows), pl.cdiv(hw, t_hw))
    tail_cols = hw - (grid[1] - 1) * t_hw
    if tail_cols == t_hw:
        tail_cols = 0  # every hw block is full width
    inv_hw = 1.0 / float(hw)

    # No padding / copying of the input (was a full extra read+write pass).
    x2d = x.reshape(rows, hw)

    cost = pl.CostEstimate(
        flops=rows * hw + rows,
        transcendentals=0,
        bytes_accessed=rows * hw * itemsize + rows * itemsize,
    )

    out2d = pl.pallas_call(
        _make_gap_kernel(inv_hw, tail_cols),
        out_shape=jax.ShapeDtypeStruct((rows, 1), x.dtype),
        grid_spec=pltpu.PrefetchScalarGridSpec(
            num_scalar_prefetch=0,
            grid=grid,
            in_specs=[pl.BlockSpec((t_rows, t_hw), lambda i, k: (i, k))],
            out_specs=pl.BlockSpec((t_rows, 1), lambda i, k: (i, 0)),
            scratch_shapes=[pltpu.VMEM((t_rows, 1), jnp.float32)],
        ),
        compiler_params=pltpu.CompilerParams(
            dimension_semantics=("parallel", "arbitrary"),
            vmem_limit_bytes=vmem_limit,
        ),
        cost_estimate=cost,
    )(x2d)

    # TODO(synk): finalize stores are (t_rows, 1) masked vst; a lane-dense
    # (1, t_rows) store (one XLU relayout per row tile) would shave finalize
    # cost for very small HW, but output writes are only ~1/HW of HBM traffic.
    if flatten:
        return out2d.reshape(n, c)
    return out2d.reshape(n, c, 1, 1)


if __name__ == "__main__":
    key = jax.random.PRNGKey(0)
    N, C, H, W = 2, 4, 16, 16
    x = jax.random.normal(key, (N, C, H, W), dtype=jnp.float32)

    # flatten=False path: (N, C, 1, 1)
    out = global_avg_pool(x, flatten=False)
    out = jax.block_until_ready(out)

    # flatten=True path: (N, C)
    out_flat = global_avg_pool(x, flatten=True)
    out_flat = jax.block_until_ready(out_flat)

    # correctness check vs. plain JAX reference
    ref = jnp.mean(x.reshape(N, C, -1), axis=-1)
    assert out.shape == (N, C, 1, 1)
    assert out_flat.shape == (N, C)
    assert jnp.allclose(out.reshape(N, C), ref, atol=1e-5, rtol=1e-5)
    assert jnp.allclose(out_flat, ref, atol=1e-5, rtol=1e-5)

    # extra check: ragged rows and a ragged HW tail (exercises mask-free path
    # removal of padding), small enough to stay cheap.
    N2, C2, H2, W2 = 3, 5, 7, 7
    x2 = jax.random.normal(key, (N2, C2, H2, W2), dtype=jnp.float32)
    out2 = jax.block_until_ready(global_avg_pool(x2, flatten=True))
    ref2 = jnp.mean(x2.reshape(N2, C2, -1), axis=-1)
    assert jnp.allclose(out2, ref2, atol=1e-5, rtol=1e-5)

    print("KERNEL_OK")
</pallas_src>

<mosaic_0001>
module attributes {stable_mosaic.version = 11 : i64} {
  func.func @kernel(%arg0: i32, %arg1: i32, %arg2: memref<8x256xf32, #tpu.memory_space<vmem>>, %arg3: memref<8x1xf32, #tpu.memory_space<vmem>>, %arg4: memref<8x1xf32, #tpu.memory_space<vmem>>) attributes {dimension_semantics = [#tpu.dimension_semantics<parallel>, #tpu.dimension_semantics<arbitrary>], iteration_bounds = array<i64: 1, 1>, scalar_prefetch = 0 : i64, scratch_operands = 1 : i64, tpu.core_type = #tpu.core_type<tc>, window_params = [{transform_indices = @transform_0, window_bounds = array<i64: 8, 256>}, {transform_indices = @transform_1, window_bounds = array<i64: 8, 1>}]} {
    %c0_i32 = arith.constant 0 : i32
    %0 = arith.cmpi eq, %arg1, %c0_i32 : i32
    %1 = arith.extui %0 : i1 to i32
    %c0_i32_0 = arith.constant 0 : i32
    %2 = arith.cmpi ne, %1, %c0_i32_0 : i32
    scf.if %2 {
      %cst_8 = arith.constant 0.000000e+00 : f32
      %12 = vector.broadcast %cst_8 : f32 to vector<8x1xf32>
      %c0_9 = arith.constant 0 : index
      %c0_10 = arith.constant 0 : index
      %13 = vector.load %arg4[%c0_9, %c0_10] : memref<8x1xf32, #tpu.memory_space<vmem>>, vector<8x1xf32>
      tpu.vector_store %arg4[%c0_9, %c0_10], %12 {strides = array<i32>} : memref<8x1xf32, #tpu.memory_space<vmem>>, vector<8x1xf32>,
    } else {
    }
    %c0 = arith.constant 0 : index
    %c0_1 = arith.constant 0 : index
    %3 = vector.load %arg4[%c0, %c0_1] : memref<8x1xf32, #tpu.memory_space<vmem>>, vector<8x1xf32>
    %c0_2 = arith.constant 0 : index
    %c0_3 = arith.constant 0 : index
    %4 = vector.load %arg2[%c0_2, %c0_3] : memref<8x256xf32, #tpu.memory_space<vmem>>, vector<8x256xf32>
    %cst = arith.constant dense<0.000000e+00> : vector<8xf32>
    %5 = vector.multi_reduction <add>, %4, %cst [1] : vector<8x256xf32> to vector<8xf32>
    %6 = vector.shape_cast %5 : vector<8xf32> to vector<8x1xf32>
    %7 = arith.addf %3, %6 : vector<8x1xf32>
    %c0_4 = arith.constant 0 : index
    %c0_5 = arith.constant 0 : index
    %8 = vector.load %arg4[%c0_4, %c0_5] : memref<8x1xf32, #tpu.memory_space<vmem>>, vector<8x1xf32>
    tpu.vector_store %arg4[%c0_4, %c0_5], %7 {strides = array<i32>} : memref<8x1xf32, #tpu.memory_space<vmem>>, vector<8x1xf32>,
    %c0_i32_6 = arith.constant 0 : i32
    %9 = arith.cmpi eq, %arg1, %c0_i32_6 : i32
    %10 = arith.extui %9 : i1 to i32
    %c0_i32_7 = arith.constant 0 : i32
    %11 = arith.cmpi ne, %10, %c0_i32_7 : i32
    scf.if %11 {
      %c0_8 = arith.constant 0 : index
      %c0_9 = arith.constant 0 : index
      %12 = vector.load %arg4[%c0_8, %c0_9] : memref<8x1xf32, #tpu.memory_space<vmem>>, vector<8x1xf32>
      %cst_10 = arith.constant 3.906250e-03 : f32
      %13 = vector.broadcast %cst_10 : f32 to vector<8x1xf32>
      %14 = arith.mulf %12, %13 : vector<8x1xf32>
      %c0_11 = arith.constant 0 : index
      %c0_12 = arith.constant 0 : index
      %15 = vector.load %arg3[%c0_11, %c0_12] : memref<8x1xf32, #tpu.memory_space<vmem>>, vector<8x1xf32>
      tpu.vector_store %arg3[%c0_11, %c0_12], %14 {strides = array<i32>} : memref<8x1xf32, #tpu.memory_space<vmem>>, vector<8x1xf32>,
    } else {
    }
    return
  }
  func.func @transform_0(%arg0: i32, %arg1: i32) -> (i32, i32) {
    %c0_i32 = arith.constant 0 : i32
    return %arg0, %arg1 : i32, i32
  }
  func.func @transform_1(%arg0: i32, %arg1: i32) -> (i32, i32) {
    %c0_i32 = arith.constant 0 : i32
    %c0_i32_0 = arith.constant 0 : i32
    return %arg0, %c0_i32 : i32, i32
  }
}

</mosaic_0001>

<llo_original>
// kernel: tpu_custom_call.1
$region0: #{tpu_custom_call.1}
  #allocation0 [shape = 'u32[]', space=smem, size = 0x4, offset = 0x4, fixed_abs, tag = 'smem constant byte address 0x4 - core index']
  #allocation1 [shape = 'u32[144,128]{1,0:T(1,128)}', space=vmem, size = 0x12000, scoped, tag = 'internal scratch']
  #allocation2 [shape = 'f32[8,1]{1,0:T(8,128)}', space=vmem, size = 0x1000, scoped, tag = 'scratch operand']
  %s0 = inlined_call_operand.hbm [shape: f32[8,256], index: 0, kind: input, shape index: {}]
  %s1 = inlined_call_operand.vmem [shape: f32[8,1], index: 1, kind: output, shape index: {}]
  %s2 = sld [smem:[#allocation0]]
  $region26: #{tpu_custom_call.1} parent=0
    _
  %s4 = ssub.s32 1, %s2
  %s5 = scalar_select 0, %s4, %s2
  $region1: #{tpu_custom_call.1} parent=0
    #allocation3 [shape = 'u8[8192]{0}', space=vmem, size = 0x2000, scoped, tag = 'input window, operand 0, single buffered']
    #allocation4 [shape = 's32[1]{0}', space=sflag, size = 0x4, scoped, tag = 'scoped memory for tpu_custom_call.1']
    %6 = vsyncpa [#allocation4], 0
    // Predicated region
    $region2: #{tpu_custom_call.1} parent=1 // pred_check
      _
    $region3: #{tpu_custom_call.1} parent=1 // pred_check_branch
      %8 = sbr.rel (0) target = $region5
    $region4: #{tpu_custom_call.1} parent=1 // pred_region
      %s10 = ssub.s32 256, 256
      %11 = vsyncadd [#allocation4], %s10
      %s13 = sshll.u32 [#allocation3], 4
      %s14 = int_to_ptr.vmem [resolvable:$true] %s13
      %16 = dma.hbm_to_vmem [thread:$0]  %s0, 256, %s14, [#allocation4]
    $region5: #{tpu_custom_call.1} parent=1 // pred_fallthru
      _
    // Predicated region
    $region6: #{tpu_custom_call.1} parent=1 // pred_check
      _
    $region7: #{tpu_custom_call.1} parent=1 // pred_check_branch
      %18 = sbr.rel (0) target = $region9
    $region8: #{tpu_custom_call.1} parent=1 // pred_region
      %19 = dma.done [#allocation4], 256
    $region9: #{tpu_custom_call.1} parent=1 // pred_fallthru
      _
    %p20 = scmp.eq.s32.totalorder 0, 0
    // Predicated region
    $region10: #{tpu_custom_call.1} parent=1 // pred_check
      %p21 = pneg %p20
    $region11: #{tpu_custom_call.1} parent=1 // pred_check_branch
      %23 = sbr.rel (%p21) target = $region13
    $region12: #{tpu_custom_call.1} parent=1 // pred_region
      %vm24 = vcmask 7168
      %25 = vst.msk [vmem:[#allocation2] sm:$0xff] %vm24, 0.0
    $region13: #{tpu_custom_call.1} parent=1 // pred_fallthru
      _
    %v26 = vld [vmem:[#allocation2] sm:$0xff]
    %v27 = vld [vmem:[#allocation3] sm:$0xff]
    %v28 = vld [vmem:[#allocation3 + $0x8] sm:$0xff]
    %v29 = vadd.f32 %v27, %v28
    %30 = vadd.xlane.f32.xlu0 %v29
    %v31 = vpop.xlane.xlu0 %30
    %v32 = vadd.f32 %v26, %v31
    %vm33 = vcmask 7168
    %34 = vst.msk [vmem:[#allocation2] sm:$0xff] %vm33, %v32
    // Predicated region
    $region14: #{tpu_custom_call.1} parent=1 // pred_check
      %p35 = pneg %p20
    $region15: #{tpu_custom_call.1} parent=1 // pred_check_branch
      %37 = sbr.rel (%p35) target = $region17
    $region16: #{tpu_custom_call.1} parent=1 // pred_region
      %v38 = vld [vmem:[#allocation2] sm:$0xff]
      %v39 = vmul.f32 %v38, 0.00390625
      %40 = vst.msk [vmem:[%s1] sm:$0xff] %vm33, %v39
    $region17: #{tpu_custom_call.1} parent=1 // pred_fallthru
      _
    // Predicated region
    $region18: #{tpu_custom_call.1} parent=1 // pred_check
      _
    $region19: #{tpu_custom_call.1} parent=1 // pred_check_branch
      %42 = sbr.rel (0) target = $region21
    $region20: #{tpu_custom_call.1} parent=1 // pred_region
      _
    $region21: #{tpu_custom_call.1} parent=1 // pred_fallthru
      _
    // Predicated region
    $region22: #{tpu_custom_call.1} parent=1 // pred_check
      _
    $region23: #{tpu_custom_call.1} parent=1 // pred_check_branch
      %44 = sbr.rel (0) target = $region25
    $region24: #{tpu_custom_call.1} parent=1 // pred_region
      _
    $region25: #{tpu_custom_call.1} parent=1 // pred_fallthru
      _
    %45 = vsyncpa [#allocation4], 1

</llo_original>
